<compile_context>
chip_gen: v6e
topology: v6e:2x2x1
jax: 0.10.0
libtpu: 0.0.40
codegen_flags: <defaults>
</compile_context>

<pallas_src>
import functools

import jax
import jax.numpy as jnp
from jax.experimental import pallas as pl
from jax.experimental.pallas import tpu as pltpu


# ----------------------------- in-kernel helpers -----------------------------

def _erf(x):
    # Abramowitz & Stegun 7.1.26, |err| <= 1.5e-7 (the exp lands on the EUP slot).
    a1, a2, a3, a4, a5 = 0.254829592, -0.284496736, 1.421413741, -1.453152027, 1.061405429
    p = 0.3275911
    s = jnp.where(x >= 0.0, 1.0, -1.0).astype(x.dtype)
    ax = jnp.abs(x)
    # Exact divide kept on purpose: pl.reciprocal(approx=True) (~2^-12 rel err)
    # would eat most of the 1e-4 tolerance budget for no measurable win here.
    t = 1.0 / (1.0 + p * ax)
    poly = ((((a5 * t + a4) * t + a3) * t + a2) * t + a1) * t
    return s * (1.0 - poly * jnp.exp(-ax * ax))


def _gelu_exact(x):
    return 0.5 * x * (1.0 + _erf(x * 0.7071067811865476))


# --------------------------------- kernel ------------------------------------

def _gcn_bunn_kernel(adj_ref, inv_sqrt_ref, x_ref, w1_ref, b1_ref, w2_ref, b2_ref,
                     out_ref, *, tau, max_degree, dim):
    x = x_ref[...]                       # (n, dim)
    adj = adj_ref[...]                   # (n, n) raw adjacency, adj[v,u] = edge u->v
    inv_sqrt = inv_sqrt_ref[...]         # (n, 1)  1/sqrt(out_degree), 0 for deg==0

    # Truncated heat-kernel diffusion series. Normalization D^{-1/2} A D^{-1/2}
    # is folded in as two cheap (n,dim) row-scalings per step instead of ever
    # building an n^2 Ahat operand.
    h = x
    curr = x
    for k in range(1, max_degree + 1):   # small static trip count -> unrolled
        agg = inv_sqrt * jnp.dot(adj, inv_sqrt * curr,
                                 preferred_element_type=jnp.float32)
        curr = (-tau / k) * (curr - agg)
        h = h + curr

    # FeedForwardModule on cat([x, h]): the concat is eliminated by splitting w1
    # with zero-cost static sublane views of the whole (2*dim, hid) weight ref.
    w1x = w1_ref[:dim, :]
    w1h = w1_ref[dim:, :]
    z = (jnp.dot(x, w1x, preferred_element_type=jnp.float32)
         + jnp.dot(h, w1h, preferred_element_type=jnp.float32)
         + b1_ref[...])
    z = _gelu_exact(z)
    out = jnp.dot(z, w2_ref[...], preferred_element_type=jnp.float32) + b2_ref[...]
    out_ref[...] = out.astype(out_ref.dtype)


# --------------------------------- wrapper -----------------------------------

def gcn_bunn_forward(adj, x, node_rep, params, *, tau, max_degree):
    """adj[v, u] = 1.0 iff the graph has an edge u -> v (dense adjacency)."""
    del node_rep  # GCNBuNNModule.forward never uses node_rep.
    n, dim = x.shape
    w1, b1, w2, b2 = params
    hid = w1.shape[1]

    # Only O(n) graph preprocessing left in the wrapper (XLA fuses it into one
    # tiny op): out_degrees + guarded rsqrt. No n^2 Ahat is ever materialised.
    deg = jnp.sum(adj, axis=0)                                      # out_degree(u)
    inv_sqrt = jnp.where(deg > 0.0, jax.lax.rsqrt(deg), 0.0)
    inv_sqrt = inv_sqrt.reshape(n, 1).astype(x.dtype)

    # Advisory cost estimate (flops: diffusion matmuls + MLP; one exp per GELU elem).
    flops = (max_degree * (2 * n * n * dim + 6 * n * dim)
             + 2 * n * dim * hid            # x @ w1[:dim]
             + 2 * n * dim * hid            # h @ w1[dim:]
             + 2 * n * hid * dim            # z @ w2
             + 16 * n * hid)                # GELU polynomial + biases
    transcendentals = n * hid
    bytes_accessed = 4 * (n * n + n + 2 * n * dim
                          + 2 * dim * hid + hid + hid * dim + dim)

    kern = functools.partial(_gcn_bunn_kernel, tau=tau, max_degree=max_degree, dim=dim)
    return pl.pallas_call(
        kern,
        out_shape=jax.ShapeDtypeStruct((n, dim), x.dtype),
        grid_spec=pltpu.PrefetchScalarGridSpec(
            num_scalar_prefetch=0,
            grid=(1,),                        # whole problem is one VMEM-resident block
            in_specs=[
                pl.BlockSpec((n, n), lambda i: (0, 0)),          # adj (raw)
                pl.BlockSpec((n, 1), lambda i: (0, 0)),          # inv_sqrt degrees
                pl.BlockSpec((n, dim), lambda i: (0, 0)),        # x
                pl.BlockSpec((2 * dim, hid), lambda i: (0, 0)),  # w1 (whole, split in-kernel)
                pl.BlockSpec((1, hid), lambda i: (0, 0)),        # b1
                pl.BlockSpec((hid, dim), lambda i: (0, 0)),      # w2
                pl.BlockSpec((1, dim), lambda i: (0, 0)),        # b2
            ],
            out_specs=pl.BlockSpec((n, dim), lambda i: (0, 0))),
        compiler_params=pltpu.CompilerParams(
            dimension_semantics=("arbitrary",)),
        cost_estimate=pl.CostEstimate(flops=flops,
                                      transcendentals=transcendentals,
                                      bytes_accessed=bytes_accessed),
    )(adj, inv_sqrt, x, w1, b1, w2, b2)


# --------------------------- pure-JAX reference -------------------------------

def reference(adj, x, params, tau, max_degree):
    hp = jax.lax.Precision.HIGHEST
    deg = jnp.sum(adj, axis=0)
    inv_sqrt = jnp.where(deg > 0.0, 1.0 / jnp.sqrt(deg), 0.0)
    ahat = adj * inv_sqrt[None, :] * inv_sqrt[:, None]
    h = x
    curr = x
    for k in range(1, max_degree + 1):
        curr = (-tau / k) * (curr - jnp.dot(ahat, curr, precision=hp))
        h = h + curr
    w1, b1, w2, b2 = params
    hcat = jnp.concatenate([x, h], axis=1)
    z = jax.nn.gelu(jnp.dot(hcat, w1, precision=hp) + b1, approximate=False)
    return jnp.dot(z, w2, precision=hp) + b2


# ----------------------------------- main -------------------------------------

if __name__ == "__main__":
    # Module config: dim=32, hidden_dim_multiplier=2, bundle_dim=2, num_bundles=4,
    # max_degree=4, tau=0.1  (input_dim_multiplier is fixed to 2 by the module).
    num_nodes = 64
    dim = 32
    hidden_dim_multiplier = 2
    bundle_dim = 2
    num_bundles = 4
    max_degree = 4
    tau = 0.1
    hidden = dim * hidden_dim_multiplier       # 64
    in_dim = 2 * dim                           # 64

    key = jax.random.PRNGKey(0)
    ka, kx, kr, k1, k2, k3, k4 = jax.random.split(key, 7)

    # Deterministic undirected random graph with self-loops, dense adjacency
    # A[v, u] = 1 iff edge u -> v (self-loops guarantee nonzero out-degrees).
    upper = (jax.random.uniform(ka, (num_nodes, num_nodes)) < 0.25).astype(jnp.float32)
    upper = jnp.triu(upper, k=1)
    adj = upper + upper.T + jnp.eye(num_nodes, dtype=jnp.float32)

    x = jax.random.normal(kx, (num_nodes, dim), jnp.float32)
    # node_rep is part of the module's forward signature but never used by it.
    node_rep = jax.random.normal(kr, (num_nodes, num_bundles, bundle_dim, bundle_dim),
                                 jnp.float32)

    # FeedForwardModule params (Linear weights stored as [in, out] for JAX matmul).
    w1 = 0.1 * jax.random.normal(k1, (in_dim, hidden), jnp.float32)
    b1 = 0.1 * jax.random.normal(k2, (1, hidden), jnp.float32)
    w2 = 0.1 * jax.random.normal(k3, (hidden, dim), jnp.float32)
    b2 = 0.1 * jax.random.normal(k4, (1, dim), jnp.float32)
    params = (w1, b1, w2, b2)

    out = gcn_bunn_forward(adj, x, node_rep, params, tau=tau, max_degree=max_degree)
    out = jax.block_until_ready(out)

    ref = reference(adj, x, params, tau, max_degree)
    assert out.shape == (num_nodes, dim)
    assert jnp.allclose(out, ref, rtol=1e-4, atol=1e-4), \
        f"max abs err {jnp.max(jnp.abs(out - ref))}"

    print("KERNEL_OK")
</pallas_src>

<mosaic_0001>
module attributes {stable_mosaic.version = 11 : i64} {
  func.func @_gcn_bunn_kernel(%arg0: i32, %arg1: memref<64x64xf32, #tpu.memory_space<vmem>>, %arg2: memref<64x1xf32, #tpu.memory_space<vmem>>, %arg3: memref<64x32xf32, #tpu.memory_space<vmem>>, %arg4: memref<64x64xf32, #tpu.memory_space<vmem>>, %arg5: memref<1x64xf32, #tpu.memory_space<vmem>>, %arg6: memref<64x32xf32, #tpu.memory_space<vmem>>, %arg7: memref<1x32xf32, #tpu.memory_space<vmem>>, %arg8: memref<64x32xf32, #tpu.memory_space<vmem>>) attributes {dimension_semantics = [#tpu.dimension_semantics<arbitrary>], iteration_bounds = array<i64: 1>, scalar_prefetch = 0 : i64, scratch_operands = 0 : i64, tpu.core_type = #tpu.core_type<tc>, window_params = [{pipeline_mode = #tpu.pipeline_mode<synchronous>, transform_indices = @transform_0, window_bounds = array<i64: 64, 64>}, {pipeline_mode = #tpu.pipeline_mode<synchronous>, transform_indices = @transform_1, window_bounds = array<i64: 64, 1>}, {pipeline_mode = #tpu.pipeline_mode<synchronous>, transform_indices = @transform_2, window_bounds = array<i64: 64, 32>}, {pipeline_mode = #tpu.pipeline_mode<synchronous>, transform_indices = @transform_3, window_bounds = array<i64: 64, 64>}, {pipeline_mode = #tpu.pipeline_mode<synchronous>, transform_indices = @transform_4, window_bounds = array<i64: 1, 64>}, {pipeline_mode = #tpu.pipeline_mode<synchronous>, transform_indices = @transform_5, window_bounds = array<i64: 64, 32>}, {pipeline_mode = #tpu.pipeline_mode<synchronous>, transform_indices = @transform_6, window_bounds = array<i64: 1, 32>}, {pipeline_mode = #tpu.pipeline_mode<synchronous>, transform_indices = @transform_7, window_bounds = array<i64: 64, 32>}]} {
    %c0 = arith.constant 0 : index
    %c0_0 = arith.constant 0 : index
    %0 = vector.load %arg3[%c0, %c0_0] : memref<64x32xf32, #tpu.memory_space<vmem>>, vector<64x32xf32>
    %c0_1 = arith.constant 0 : index
    %c0_2 = arith.constant 0 : index
    %1 = vector.load %arg1[%c0_1, %c0_2] : memref<64x64xf32, #tpu.memory_space<vmem>>, vector<64x64xf32>
    %c0_3 = arith.constant 0 : index
    %c0_4 = arith.constant 0 : index
    %2 = vector.load %arg2[%c0_3, %c0_4] : memref<64x1xf32, #tpu.memory_space<vmem>>, vector<64x1xf32>
    %3 = vector.broadcast %2 : vector<64x1xf32> to vector<64x32xf32>
    %4 = arith.mulf %3, %0 : vector<64x32xf32>
    %cst = arith.constant dense<0.000000e+00> : vector<64x32xf32>
    %5 = tpu.matmul %1, %4, %cst {dimension_numbers = #tpu.dot_dimension_numbers<[1], [0], [0], [1], [0, 0, 1, 1], [], []>} : vector<64x64xf32>, vector<64x32xf32>, vector<64x32xf32> -> vector<64x32xf32>
    %6 = vector.broadcast %2 : vector<64x1xf32> to vector<64x32xf32>
    %7 = arith.mulf %6, %5 : vector<64x32xf32>
    %8 = arith.subf %0, %7 : vector<64x32xf32>
    %cst_5 = arith.constant -1.000000e-01 : f32
    %9 = vector.broadcast %cst_5 : f32 to vector<64x32xf32>
    %10 = arith.mulf %9, %8 : vector<64x32xf32>
    %11 = arith.addf %0, %10 : vector<64x32xf32>
    %12 = vector.broadcast %2 : vector<64x1xf32> to vector<64x32xf32>
    %13 = arith.mulf %12, %10 : vector<64x32xf32>
    %cst_6 = arith.constant dense<0.000000e+00> : vector<64x32xf32>
    %14 = tpu.matmul %1, %13, %cst_6 {dimension_numbers = #tpu.dot_dimension_numbers<[1], [0], [0], [1], [0, 0, 1, 1], [], []>} : vector<64x64xf32>, vector<64x32xf32>, vector<64x32xf32> -> vector<64x32xf32>
    %15 = vector.broadcast %2 : vector<64x1xf32> to vector<64x32xf32>
    %16 = arith.mulf %15, %14 : vector<64x32xf32>
    %17 = arith.subf %10, %16 : vector<64x32xf32>
    %cst_7 = arith.constant -5.000000e-02 : f32
    %18 = vector.broadcast %cst_7 : f32 to vector<64x32xf32>
    %19 = arith.mulf %18, %17 : vector<64x32xf32>
    %20 = arith.addf %11, %19 : vector<64x32xf32>
    %21 = vector.broadcast %2 : vector<64x1xf32> to vector<64x32xf32>
    %22 = arith.mulf %21, %19 : vector<64x32xf32>
    %cst_8 = arith.constant dense<0.000000e+00> : vector<64x32xf32>
    %23 = tpu.matmul %1, %22, %cst_8 {dimension_numbers = #tpu.dot_dimension_numbers<[1], [0], [0], [1], [0, 0, 1, 1], [], []>} : vector<64x64xf32>, vector<64x32xf32>, vector<64x32xf32> -> vector<64x32xf32>
    %24 = vector.broadcast %2 : vector<64x1xf32> to vector<64x32xf32>
    %25 = arith.mulf %24, %23 : vector<64x32xf32>
    %26 = arith.subf %19, %25 : vector<64x32xf32>
    %cst_9 = arith.constant -0.0333333351 : f32
    %27 = vector.broadcast %cst_9 : f32 to vector<64x32xf32>
    %28 = arith.mulf %27, %26 : vector<64x32xf32>
    %29 = arith.addf %20, %28 : vector<64x32xf32>
    %30 = vector.broadcast %2 : vector<64x1xf32> to vector<64x32xf32>
    %31 = arith.mulf %30, %28 : vector<64x32xf32>
    %cst_10 = arith.constant dense<0.000000e+00> : vector<64x32xf32>
    %32 = tpu.matmul %1, %31, %cst_10 {dimension_numbers = #tpu.dot_dimension_numbers<[1], [0], [0], [1], [0, 0, 1, 1], [], []>} : vector<64x64xf32>, vector<64x32xf32>, vector<64x32xf32> -> vector<64x32xf32>
    %33 = vector.broadcast %2 : vector<64x1xf32> to vector<64x32xf32>
    %34 = arith.mulf %33, %32 : vector<64x32xf32>
    %35 = arith.subf %28, %34 : vector<64x32xf32>
    %cst_11 = arith.constant -2.500000e-02 : f32
    %36 = vector.broadcast %cst_11 : f32 to vector<64x32xf32>
    %37 = arith.mulf %36, %35 : vector<64x32xf32>
    %38 = arith.addf %29, %37 : vector<64x32xf32>
    %c0_12 = arith.constant 0 : index
    %c0_13 = arith.constant 0 : index
    %39 = vector.load %arg4[%c0_12, %c0_13] : memref<64x64xf32, #tpu.memory_space<vmem>>, vector<32x64xf32>
    %c32 = arith.constant 32 : index
    %c0_14 = arith.constant 0 : index
    %40 = vector.load %arg4[%c32, %c0_14] : memref<64x64xf32, #tpu.memory_space<vmem>>, vector<32x64xf32>
    %cst_15 = arith.constant dense<0.000000e+00> : vector<64x64xf32>
    %41 = tpu.matmul %0, %39, %cst_15 {dimension_numbers = #tpu.dot_dimension_numbers<[1], [0], [0], [1], [0, 0, 1, 1], [], []>} : vector<64x32xf32>, vector<32x64xf32>, vector<64x64xf32> -> vector<64x64xf32>
    %cst_16 = arith.constant dense<0.000000e+00> : vector<64x64xf32>
    %42 = tpu.matmul %38, %40, %cst_16 {dimension_numbers = #tpu.dot_dimension_numbers<[1], [0], [0], [1], [0, 0, 1, 1], [], []>} : vector<64x32xf32>, vector<32x64xf32>, vector<64x64xf32> -> vector<64x64xf32>
    %43 = arith.addf %41, %42 : vector<64x64xf32>
    %c0_17 = arith.constant 0 : index
    %c0_18 = arith.constant 0 : index
    %44 = vector.load %arg5[%c0_17, %c0_18] : memref<1x64xf32, #tpu.memory_space<vmem>>, vector<1x64xf32>
    %45 = vector.broadcast %44 : vector<1x64xf32> to vector<64x64xf32>
    %46 = arith.addf %43, %45 : vector<64x64xf32>
    %cst_19 = arith.constant 5.000000e-01 : f32
    %47 = vector.broadcast %cst_19 : f32 to vector<64x64xf32>
    %48 = arith.mulf %47, %46 : vector<64x64xf32>
    %cst_20 = arith.constant 0.707106769 : f32
    %49 = vector.broadcast %cst_20 : f32 to vector<64x64xf32>
    %50 = arith.mulf %46, %49 : vector<64x64xf32>
    %cst_21 = arith.constant 0.000000e+00 : f32
    %51 = vector.broadcast %cst_21 : f32 to vector<64x64xf32>
    %52 = arith.cmpf oge, %50, %51 : vector<64x64xf32>
    %cst_22 = arith.constant 1.000000e+00 : f32
    %cst_23 = arith.constant -1.000000e+00 : f32
    %53 = vector.broadcast %cst_22 : f32 to vector<64x64xf32>
    %54 = vector.broadcast %cst_23 : f32 to vector<64x64xf32>
    %55 = arith.select %52, %53, %54 : vector<64x64xi1>, vector<64x64xf32>
    %56 = math.absf %50 : vector<64x64xf32>
    %cst_24 = arith.constant 0.327591091 : f32
    %57 = vector.broadcast %cst_24 : f32 to vector<64x64xf32>
    %58 = arith.mulf %57, %56 : vector<64x64xf32>
    %cst_25 = arith.constant 1.000000e+00 : f32
    %59 = vector.broadcast %cst_25 : f32 to vector<64x64xf32>
    %60 = arith.addf %59, %58 : vector<64x64xf32>
    %cst_26 = arith.constant 1.000000e+00 : f32
    %61 = vector.broadcast %cst_26 : f32 to vector<64x64xf32>
    %62 = arith.divf %61, %60 : vector<64x64xf32>
    %cst_27 = arith.constant 1.06140542 : f32
    %63 = vector.broadcast %cst_27 : f32 to vector<64x64xf32>
    %64 = arith.mulf %63, %62 : vector<64x64xf32>
    %cst_28 = arith.constant -1.45315206 : f32
    %65 = vector.broadcast %cst_28 : f32 to vector<64x64xf32>
    %66 = arith.addf %64, %65 : vector<64x64xf32>
    %67 = arith.mulf %66, %62 : vector<64x64xf32>
    %cst_29 = arith.constant 1.42141378 : f32
    %68 = vector.broadcast %cst_29 : f32 to vector<64x64xf32>
    %69 = arith.addf %67, %68 : vector<64x64xf32>
    %70 = arith.mulf %69, %62 : vector<64x64xf32>
    %cst_30 = arith.constant -0.284496725 : f32
    %71 = vector.broadcast %cst_30 : f32 to vector<64x64xf32>
    %72 = arith.addf %70, %71 : vector<64x64xf32>
    %73 = arith.mulf %72, %62 : vector<64x64xf32>
    %cst_31 = arith.constant 0.254829586 : f32
    %74 = vector.broadcast %cst_31 : f32 to vector<64x64xf32>
    %75 = arith.addf %73, %74 : vector<64x64xf32>
    %76 = arith.mulf %75, %62 : vector<64x64xf32>
    %cst_32 = arith.constant 0.000000e+00 : f32
    %77 = vector.broadcast %cst_32 : f32 to vector<64x64xf32>
    %78 = arith.subf %77, %56 : vector<64x64xf32>
    %79 = arith.mulf %78, %56 : vector<64x64xf32>
    %80 = math.exp %79 : vector<64x64xf32>
    %81 = arith.mulf %76, %80 : vector<64x64xf32>
    %cst_33 = arith.constant 1.000000e+00 : f32
    %82 = vector.broadcast %cst_33 : f32 to vector<64x64xf32>
    %83 = arith.subf %82, %81 : vector<64x64xf32>
    %84 = arith.mulf %55, %83 : vector<64x64xf32>
    %cst_34 = arith.constant 1.000000e+00 : f32
    %85 = vector.broadcast %cst_34 : f32 to vector<64x64xf32>
    %86 = arith.addf %85, %84 : vector<64x64xf32>
    %87 = arith.mulf %48, %86 : vector<64x64xf32>
    %c0_35 = arith.constant 0 : index
    %c0_36 = arith.constant 0 : index
    %88 = vector.load %arg6[%c0_35, %c0_36] : memref<64x32xf32, #tpu.memory_space<vmem>>, vector<64x32xf32>
    %cst_37 = arith.constant dense<0.000000e+00> : vector<64x32xf32>
    %89 = tpu.matmul %87, %88, %cst_37 {dimension_numbers = #tpu.dot_dimension_numbers<[1], [0], [0], [1], [0, 0, 1, 1], [], []>} : vector<64x64xf32>, vector<64x32xf32>, vector<64x32xf32> -> vector<64x32xf32>
    %c0_38 = arith.constant 0 : index
    %c0_39 = arith.constant 0 : index
    %90 = vector.load %arg7[%c0_38, %c0_39] : memref<1x32xf32, #tpu.memory_space<vmem>>, vector<1x32xf32>
    %91 = vector.broadcast %90 : vector<1x32xf32> to vector<64x32xf32>
    %92 = arith.addf %89, %91 : vector<64x32xf32>
    %c0_40 = arith.constant 0 : index
    %c0_41 = arith.constant 0 : index
    %93 = vector.load %arg8[%c0_40, %c0_41] : memref<64x32xf32, #tpu.memory_space<vmem>>, vector<64x32xf32>
    tpu.vector_store %arg8[%c0_40, %c0_41], %92 {strides = array<i32>} : memref<64x32xf32, #tpu.memory_space<vmem>>, vector<64x32xf32>,
    return
  }
  func.func @transform_0(%arg0: i32) -> (i32, i32) {
    %c0_i32 = arith.constant 0 : i32
    %c0_i32_0 = arith.constant 0 : i32
    %c0_i32_1 = arith.constant 0 : i32
    return %c0_i32, %c0_i32_0 : i32, i32
  }
  func.func @transform_1(%arg0: i32) -> (i32, i32) {
    %c0_i32 = arith.constant 0 : i32
    %c0_i32_0 = arith.constant 0 : i32
    %c0_i32_1 = arith.constant 0 : i32
    return %c0_i32, %c0_i32_0 : i32, i32
  }
  func.func @transform_2(%arg0: i32) -> (i32, i32) {
    %c0_i32 = arith.constant 0 : i32
    %c0_i32_0 = arith.constant 0 : i32
    %c0_i32_1 = arith.constant 0 : i32
    return %c0_i32, %c0_i32_0 : i32, i32
  }
  func.func @transform_3(%arg0: i32) -> (i32, i32) {
    %c0_i32 = arith.constant 0 : i32
    %c0_i32_0 = arith.constant 0 : i32
    %c0_i32_1 = arith.constant 0 : i32
    return %c0_i32, %c0_i32_0 : i32, i32
  }
  func.func @transform_4(%arg0: i32) -> (i32, i32) {
    %c0_i32 = arith.constant 0 : i32
    %c0_i32_0 = arith.constant 0 : i32
    %c0_i32_1 = arith.constant 0 : i32
    return %c0_i32, %c0_i32_0 : i32, i32
  }
  func.func @transform_5(%arg0: i32) -> (i32, i32) {
    %c0_i32 = arith.constant 0 : i32
    %c0_i32_0 = arith.constant 0 : i32
    %c0_i32_1 = arith.constant 0 : i32
    return %c0_i32, %c0_i32_0 : i32, i32
  }
  func.func @transform_6(%arg0: i32) -> (i32, i32) {
    %c0_i32 = arith.constant 0 : i32
    %c0_i32_0 = arith.constant 0 : i32
    %c0_i32_1 = arith.constant 0 : i32
    return %c0_i32, %c0_i32_0 : i32, i32
  }
  func.func @transform_7(%arg0: i32) -> (i32, i32) {
    %c0_i32 = arith.constant 0 : i32
    %c0_i32_0 = arith.constant 0 : i32
    %c0_i32_1 = arith.constant 0 : i32
    return %c0_i32, %c0_i32_0 : i32, i32
  }
}

</mosaic_0001>

<llo_original>
// kernel: tpu_custom_call.1
$region0: #{tpu_custom_call.1}
  #allocation0 [shape = 'u32[]', space=smem, size = 0x4, offset = 0x4, fixed_abs, tag = 'smem constant byte address 0x4 - core index']
  #allocation1 [shape = 'u32[144,128]{1,0:T(1,128)}', space=vmem, size = 0x12000, scoped, tag = 'internal scratch']
  %s0 = inlined_call_operand.vmem [shape: f32[64,64], index: 0, kind: input, shape index: {}]
  %s1 = inlined_call_operand.vmem [shape: f32[64,1], index: 1, kind: input, shape index: {}]
  %s2 = inlined_call_operand.vmem [shape: f32[64,32], index: 2, kind: input, shape index: {}]
  %s3 = inlined_call_operand.vmem [shape: f32[64,64], index: 3, kind: input, shape index: {}]
  %s4 = inlined_call_operand.vmem [shape: f32[1,64], index: 4, kind: input, shape index: {}]
  %s5 = inlined_call_operand.vmem [shape: f32[64,32], index: 5, kind: input, shape index: {}]
  %s6 = inlined_call_operand.vmem [shape: f32[1,32], index: 6, kind: input, shape index: {}]
  %s7 = inlined_call_operand.vmem [shape: f32[64,32], index: 7, kind: output, shape index: {}]
  %s8 = sld [smem:[#allocation0]]
  $region38: #{tpu_custom_call.1} parent=0
    _
  %s10 = ssub.s32 1, %s8
  %s11 = scalar_select 0, %s10, %s8
  // Predicated region
  $region2: #{tpu_custom_call.1} parent=0 // pred_check
    _
  $region3: #{tpu_custom_call.1} parent=0 // pred_check_branch
    %13 = sbr.rel (0) target = $region5
  $region4: #{tpu_custom_call.1} parent=0 // pred_region
    _
  $region5: #{tpu_custom_call.1} parent=0 // pred_fallthru
    _
  // Predicated region
  $region6: #{tpu_custom_call.1} parent=0 // pred_check
    _
  $region7: #{tpu_custom_call.1} parent=0 // pred_check_branch
    %15 = sbr.rel (0) target = $region9
  $region8: #{tpu_custom_call.1} parent=0 // pred_region
    _
  $region9: #{tpu_custom_call.1} parent=0 // pred_fallthru
    _
  // Predicated region
  $region10: #{tpu_custom_call.1} parent=0 // pred_check
    _
  $region11: #{tpu_custom_call.1} parent=0 // pred_check_branch
    %17 = sbr.rel (0) target = $region13
  $region12: #{tpu_custom_call.1} parent=0 // pred_region
    _
  $region13: #{tpu_custom_call.1} parent=0 // pred_fallthru
    _
  // Predicated region
  $region14: #{tpu_custom_call.1} parent=0 // pred_check
    _
  $region15: #{tpu_custom_call.1} parent=0 // pred_check_branch
    %19 = sbr.rel (0) target = $region17
  $region16: #{tpu_custom_call.1} parent=0 // pred_region
    _
  $region17: #{tpu_custom_call.1} parent=0 // pred_fallthru
    _
  // Predicated region
  $region18: #{tpu_custom_call.1} parent=0 // pred_check
    _
  $region19: #{tpu_custom_call.1} parent=0 // pred_check_branch
    %21 = sbr.rel (0) target = $region21
  $region20: #{tpu_custom_call.1} parent=0 // pred_region
    _
  $region21: #{tpu_custom_call.1} parent=0 // pred_fallthru
    _
  // Predicated region
  $region22: #{tpu_custom_call.1} parent=0 // pred_check
    _
  $region23: #{tpu_custom_call.1} parent=0 // pred_check_branch
    %23 = sbr.rel (0) target = $region25
  $region24: #{tpu_custom_call.1} parent=0 // pred_region
    _
  $region25: #{tpu_custom_call.1} parent=0 // pred_fallthru
    _
  // Predicated region
  $region26: #{tpu_custom_call.1} parent=0 // pred_check
    _
  $region27: #{tpu_custom_call.1} parent=0 // pred_check_branch
    %25 = sbr.rel (0) target = $region29
  $region28: #{tpu_custom_call.1} parent=0 // pred_region
    _
  $region29: #{tpu_custom_call.1} parent=0 // pred_fallthru
    _
  %v26 = vld [vmem:[%s2] sm:$0xff]
  %v27 = vld [vmem:[%s2 + $0x8] sm:$0xff]
  %v28 = vld [vmem:[%s2 + $0x10] sm:$0xff]
  %v29 = vld [vmem:[%s2 + $0x18] sm:$0xff]
  %v30 = vld [vmem:[%s2 + $0x20] sm:$0xff]
  %v31 = vld [vmem:[%s2 + $0x28] sm:$0xff]
  %v32 = vld [vmem:[%s2 + $0x30] sm:$0xff]
  %v33 = vld [vmem:[%s2 + $0x38] sm:$0xff]
  %v34 = vld [vmem:[%s0] sm:$0xff]
  %v35 = vld [vmem:[%s0 + $0x8] sm:$0xff]
  %v36 = vld [vmem:[%s0 + $0x10] sm:$0xff]
  %v37 = vld [vmem:[%s0 + $0x18] sm:$0xff]
  %v38 = vld [vmem:[%s0 + $0x20] sm:$0xff]
  %v39 = vld [vmem:[%s0 + $0x28] sm:$0xff]
  %v40 = vld [vmem:[%s0 + $0x30] sm:$0xff]
  %v41 = vld [vmem:[%s0 + $0x38] sm:$0xff]
  %v42 = vld [vmem:[%s1] sm:$0xff]
  %v43 = vld [vmem:[%s1 + $0x8] sm:$0xff]
  %v44 = vld [vmem:[%s1 + $0x10] sm:$0xff]
  %v45 = vld [vmem:[%s1 + $0x18] sm:$0xff]
  %v46 = vld [vmem:[%s1 + $0x20] sm:$0xff]
  %v47 = vld [vmem:[%s1 + $0x28] sm:$0xff]
  %v48 = vld [vmem:[%s1 + $0x30] sm:$0xff]
  %v49 = vld [vmem:[%s1 + $0x38] sm:$0xff]
  %51 = vset.pattern.permute.xlu0 0
  %52 = vperm.xlu0 %51, %v42
  %v53 = vpop.permute.xlu0 %52
  %56 = vset.pattern.permute.xlu0 0
  %57 = vperm.xlu0 %56, %v43
  %v58 = vpop.permute.xlu0 %57
  %61 = vset.pattern.permute.xlu0 0
  %62 = vperm.xlu0 %61, %v44
  %v63 = vpop.permute.xlu0 %62
  %66 = vset.pattern.permute.xlu0 0
  %67 = vperm.xlu0 %66, %v45
  %v68 = vpop.permute.xlu0 %67
  %71 = vset.pattern.permute.xlu0 0
  %72 = vperm.xlu0 %71, %v46
  %v73 = vpop.permute.xlu0 %72
  %76 = vset.pattern.permute.xlu0 0
  %77 = vperm.xlu0 %76, %v47
  %v78 = vpop.permute.xlu0 %77
  %81 = vset.pattern.permute.xlu0 0
  %82 = vperm.xlu0 %81, %v48
  %v83 = vpop.permute.xlu0 %82
  %86 = vset.pattern.permute.xlu0 0
  %87 = vperm.xlu0 %86, %v49
  %v88 = vpop.permute.xlu0 %87
  %v90 = vmul.f32 %v53, %v26
  %v91 = vmul.f32 %v58, %v27
  %v92 = vmul.f32 %v63, %v28
  %v93 = vmul.f32 %v68, %v29
  %v94 = vmul.f32 %v73, %v30
  %v95 = vmul.f32 %v78, %v31
  %v96 = vmul.f32 %v83, %v32
  %v97 = vmul.f32 %v88, %v33
  %vm98 = vcmask 523264
  %v100 = vsel %vm98, %v34, 0
  %v103 = vsel %vm98, %v35, 0
  %v106 = vsel %vm98, %v36, 0
  %v109 = vsel %vm98, %v37, 0
  %v112 = vsel %vm98, %v38, 0
  %v115 = vsel %vm98, %v39, 0
  %v118 = vsel %vm98, %v40, 0
  %v121 = vsel %vm98, %v41, 0
  %123 = vmatprep.subr.mxu0 0.0
  %124 = vmatpush1.msra.mxu0 0.0
  %125 = vmatprep.subr.mxu0 0.0
  %126 = vmatpush1.msra.mxu0 0.0
  %127 = vmatprep.subr.mxu0 0.0
  %128 = vmatpush1.msra.mxu0 0.0
  %129 = vmatprep.subr.mxu0 0.0
  %130 = vmatpush1.msra.mxu0 0.0
  %131 = vmatprep.subr.mxu0 0.0
  %132 = vmatpush1.msra.mxu0 0.0
  %133 = vmatprep.subr.mxu0 0.0
  %134 = vmatpush1.msra.mxu0 0.0
  %135 = vmatprep.subr.mxu0 0.0
  %136 = vmatpush1.msra.mxu0 0.0
  %137 = vmatprep.subr.mxu0 0.0
  %138 = vmatpush1.msra.mxu0 0.0
  %139 = vmatprep.subr.mxu0 0.0
  %140 = vmatpush1.msra.mxu0 %v97
  %141 = vmatprep.subr.mxu0 0.0
  %142 = vmatpush1.msra.mxu0 %v96
  %143 = vmatprep.subr.mxu0 0.0
  %144 = vmatpush1.msra.mxu0 %v95
  %145 = vmatprep.subr.mxu0 0.0
  %146 = vmatpush1.msra.mxu0 %v94
  %147 = vmatprep.subr.mxu0 0.0
  %148 = vmatpush1.msra.mxu0 %v93
  %149 = vmatprep.subr.mxu0 0.0
  %150 = vmatpush1.msra.mxu0 %v92
  %151 = vmatprep.subr.mxu0 0.0
  %152 = vmatpush1.msra.mxu0 %v91
  %153 = vmatprep.subr.mxu0 0.0
  %154 = vmatpush1.msra.mxu0 %v90
  %155 = vmatprep.subr.mxu0 0.0
  %156 = vmatpush2.msra.mxu0 0.0
  %157 = vmatprep.subr.mxu0 0.0
  %158 = vmatpush2.msra.mxu0 0.0
  %159 = vmatprep.subr.mxu0 0.0
  %160 = vmatpush2.msra.mxu0 0.0
  %161 = vmatprep.subr.mxu0 0.0
  %162 = vmatpush2.msra.mxu0 0.0
  %163 = vmatprep.subr.mxu0 0.0
  %164 = vmatpush2.msra.mxu0 0.0
  %165 = vmatprep.subr.mxu0 0.0
  %166 = vmatpush2.msra.mxu0 0.0
  %167 = vmatprep.subr.mxu0 0.0
  %168 = vmatpush2.msra.mxu0 0.0
  %169 = vmatprep.subr.mxu0 0.0
  %170 = vmatpush2.msra.mxu0 0.0
  %171 = vmatprep.subr.mxu0 0.0
  %172 = vmatpush2.msra.mxu0 0.0
  %173 = vmatprep.subr.mxu0 0.0
  %174 = vmatpush2.msra.mxu0 0.0
  %175 = vmatprep.subr.mxu0 0.0
  %176 = vmatpush2.msra.mxu0 0.0
  %177 = vmatprep.subr.mxu0 0.0
  %178 = vmatpush2.msra.mxu0 0.0
  %179 = vmatprep.subr.mxu0 0.0
  %180 = vmatpush2.msra.mxu0 0.0
  %181 = vmatprep.subr.mxu0 0.0
  %182 = vmatpush2.msra.mxu0 0.0
  %183 = vmatprep.subr.mxu0 0.0
  %184 = vmatpush2.msra.mxu0 0.0
  %185 = vmatprep.subr.mxu0 0.0
  %186 = vmatpush2.msra.mxu0 0.0
  %187 = vmatprep.mubr.f32.mxu0 0.0
  %188 = vmatmul.mubr.f32.gmra.mxu0 %v100
  %v189 = vpop.f32.mrf.mxu0
  %v190 = vadd.f32 0.0, %v189
  %v191 = vpop.f32.mrf.mxu0
  %192 = vmatprep.mubr.f32.mxu0 0.0
  %193 = vmatmul.mubr.f32.gmra.mxu0 %v103
  %v194 = vpop.f32.mrf.mxu0
  %v195 = vadd.f32 0.0, %v194
  %v196 = vpop.f32.mrf.mxu0
  %197 = vmatprep.mubr.f32.mxu0 0.0
  %198 = vmatmul.mubr.f32.gmra.mxu0 %v106
  %v199 = vpop.f32.mrf.mxu0
  %v200 = vadd.f32 0.0, %v199
  %v201 = vpop.f32.mrf.mxu0
  %202 = vmatprep.mubr.f32.mxu0 0.0
  %203 = vmatmul.mubr.f32.gmra.mxu0 %v109
  %v204 = vpop.f32.mrf.mxu0
  %v205 = vadd.f32 0.0, %v204
  %v206 = vpop.f32.mrf.mxu0
  %207 = vmatprep.mubr.f32.mxu0 0.0
  %208 = vmatmul.mubr.f32.gmra.mxu0 %v112
  %v209 = vpop.f32.mrf.mxu0
  %v210 = vadd.f32 0.0, %v209
  %v211 = vpop.f32.mrf.mxu0
  %212 = vmatprep.mubr.f32.mxu0 0.0
  %213 = vmatmul.mubr.f32.gmra.mxu0 %v115
  %v214 = vpop.f32.mrf.mxu0
  %v215 = vadd.f32 0.0, %v214
  %v216 = vpop.f32.mrf.mxu0
  %217 = vmatprep.mubr.f32.mxu0 0.0
  %218 = vmatmul.mubr.f32.gmra.mxu0 %v118
  %v219 = vpop.f32.mrf.mxu0
  %v220 = vadd.f32 0.0, %v219
  %v221 = vpop.f32.mrf.mxu0
  %222 = vmatprep.mubr.f32.mxu0 0.0
  %223 = vmatmul.mubr.f32.gmra.mxu0 %v121
  %v224 = vpop.f32.mrf.mxu0
  %v225 = vadd.f32 0.0, %v224
  %v226 = vpop.f32.mrf.mxu0
  %227 = vdwg.mxu0
  %v228 = vmul.f32 %v53, %v190
  %v229 = vmul.f32 %v58, %v195
  %v230 = vmul.f32 %v63, %v200
  %v231 = vmul.f32 %v68, %v205
  %v232 = vmul.f32 %v73, %v210
  %v233 = vmul.f32 %v78, %v215
  %v234 = vmul.f32 %v83, %v220
  %v235 = vmul.f32 %v88, %v225
  %v236 = vsub.f32 %v26, %v228
  %v237 = vsub.f32 %v27, %v229
  %v238 = vsub.f32 %v28, %v230
  %v239 = vsub.f32 %v29, %v231
  %v240 = vsub.f32 %v30, %v232
  %v241 = vsub.f32 %v31, %v233
  %v242 = vsub.f32 %v32, %v234
  %v243 = vsub.f32 %v33, %v235
  %v244 = vmul.f32 %v236, -0.1
  %v245 = vmul.f32 %v237, -0.1
  %v246 = vmul.f32 %v238, -0.1
  %v247 = vmul.f32 %v239, -0.1
  %v248 = vmul.f32 %v240, -0.1
  %v249 = vmul.f32 %v241, -0.1
  %v250 = vmul.f32 %v242, -0.1
  %v251 = vmul.f32 %v243, -0.1
  %v252 = vadd.f32 %v26, %v244
  %v253 = vadd.f32 %v27, %v245
  %v254 = vadd.f32 %v28, %v246
  %v255 = vadd.f32 %v29, %v247
  %v256 = vadd.f32 %v30, %v248
  %v257 = vadd.f32 %v31, %v249
  %v258 = vadd.f32 %v32, %v250
  %v259 = vadd.f32 %v33, %v251
  %v260 = vmul.f32 %v53, %v244
  %v261 = vmul.f32 %v58, %v245
  %v262 = vmul.f32 %v63, %v246
  %v263 = vmul.f32 %v68, %v247
  %v264 = vmul.f32 %v73, %v248
  %v265 = vmul.f32 %v78, %v249
  %v266 = vmul.f32 %v83, %v250
  %v267 = vmul.f32 %v88, %v251
  %268 = vmatprep.subr.mxu0 0.0
  %269 = vmatpush1.msra.mxu0 0.0
  %270 = vmatprep.subr.mxu0 0.0
  %271 = vmatpush1.msra.mxu0 0.0
  %272 = vmatprep.subr.mxu0 0.0
  %273 = vmatpush1.msra.mxu0 0.0
  %274 = vmatprep.subr.mxu0 0.0
  %275 = vmatpush1.msra.mxu0 0.0
  %276 = vmatprep.subr.mxu0 0.0
  %277 = vmatpush1.msra.mxu0 0.0
  %278 = vmatprep.subr.mxu0 0.0
  %279 = vmatpush1.msra.mxu0 0.0
  %280 = vmatprep.subr.mxu0 0.0
  %281 = vmatpush1.msra.mxu0 0.0
  %282 = vmatprep.subr.mxu0 0.0
  %283 = vmatpush1.msra.mxu0 0.0
  %284 = vmatprep.subr.mxu0 0.0
  %285 = vmatpush1.msra.mxu0 %v267
  %286 = vmatprep.subr.mxu0 0.0
  %287 = vmatpush1.msra.mxu0 %v266
  %288 = vmatprep.subr.mxu0 0.0
  %289 = vmatpush1.msra.mxu0 %v265
  %290 = vmatprep.subr.mxu0 0.0
  %291 = vmatpush1.msra.mxu0 %v264
  %292 = vmatprep.subr.mxu0 0.0
  %293 = vmatpush1.msra.mxu0 %v263
  %294 = vmatprep.subr.mxu0 0.0
  %295 = vmatpush1.msra.mxu0 %v262
  %296 = vmatprep.subr.mxu0 0.0
  %297 = vmatpush1.msra.mxu0 %v261
  %298 = vmatprep.subr.mxu0 0.0
  %299 = vmatpush1.msra.mxu0 %v260
  %300 = vmatprep.subr.mxu0 0.0
  %301 = vmatpush2.msra.mxu0 0.0
  %302 = vmatprep.subr.mxu0 0.0
  %303 = vmatpush2.msra.mxu0 0.0
  %304 = vmatprep.subr.mxu0 0.0
  %305 = vmatpush2.msra.mxu0 0.0
  %306 = vmatprep.subr.mxu0 0.0
  %307 = vmatpush2.msra.mxu0 0.0
  %308 = vmatprep.subr.mxu0 0.0
  %309 = vmatpush2.msra.mxu0 0.0
  %310 = vmatprep.subr.mxu0 0.0
  %311 = vmatpush2.msra.mxu0 0.0
  %312 = vmatprep.subr.mxu0 0.0
  %313 = vmatpush2.msra.mxu0 0.0
  %314 = vmatprep.subr.mxu0 0.0
  %315 = vmatpush2.msra.mxu0 0.0
  %316 = vmatprep.subr.mxu0 0.0
  %317 = vmatpush2.msra.mxu0 0.0
  %318 = vmatprep.subr.mxu0 0.0
  %319 = vmatpush2.msra.mxu0 0.0
  %320 = vmatprep.subr.mxu0 0.0
  %321 = vmatpush2.msra.mxu0 0.0
  %322 = vmatprep.subr.mxu0 0.0
  %323 = vmatpush2.msra.mxu0 0.0
  %324 = vmatprep.subr.mxu0 0.0
  %325 = vmatpush2.msra.mxu0 0.0
  %326 = vmatprep.subr.mxu0 0.0
  %327 = vmatpush2.msra.mxu0 0.0
  %328 = vmatprep.subr.mxu0 0.0
  %329 = vmatpush2.msra.mxu0 0.0
  %330 = vmatprep.subr.mxu0 0.0
  %331 = vmatpush2.msra.mxu0 0.0
  %332 = vmatprep.mubr.f32.mxu0 0.0
  %333 = vmatmul.mubr.f32.gmra.mxu0 %v100
  %v334 = vpop.f32.mrf.mxu0
  %v335 = vadd.f32 0.0, %v334
  %v336 = vpop.f32.mrf.mxu0
  %337 = vmatprep.mubr.f32.mxu0 0.0
  %338 = vmatmul.mubr.f32.gmra.mxu0 %v103
  %v339 = vpop.f32.mrf.mxu0
  %v340 = vadd.f32 0.0, %v339
  %v341 = vpop.f32.mrf.mxu0
  %342 = vmatprep.mubr.f32.mxu0 0.0
  %343 = vmatmul.mubr.f32.gmra.mxu0 %v106
  %v344 = vpop.f32.mrf.mxu0
  %v345 = vadd.f32 0.0, %v344
  %v346 = vpop.f32.mrf.mxu0
  %347 = vmatprep.mubr.f32.mxu0 0.0
  %348 = vmatmul.mubr.f32.gmra.mxu0 %v109
  %v349 = vpop.f32.mrf.mxu0
  %v350 = vadd.f32 0.0, %v349
  %v351 = vpop.f32.mrf.mxu0
  %352 = vmatprep.mubr.f32.mxu0 0.0
  %353 = vmatmul.mubr.f32.gmra.mxu0 %v112
  %v354 = vpop.f32.mrf.mxu0
  %v355 = vadd.f32 0.0, %v354
  %v356 = vpop.f32.mrf.mxu0
  %357 = vmatprep.mubr.f32.mxu0 0.0
  %358 = vmatmul.mubr.f32.gmra.mxu0 %v115
  %v359 = vpop.f32.mrf.mxu0
  %v360 = vadd.f32 0.0, %v359
  %v361 = vpop.f32.mrf.mxu0
  %362 = vmatprep.mubr.f32.mxu0 0.0
  %363 = vmatmul.mubr.f32.gmra.mxu0 %v118
  %v364 = vpop.f32.mrf.mxu0
  %v365 = vadd.f32 0.0, %v364
  %v366 = vpop.f32.mrf.mxu0
  %367 = vmatprep.mubr.f32.mxu0 0.0
  %368 = vmatmul.mubr.f32.gmra.mxu0 %v121
  %v369 = vpop.f32.mrf.mxu0
  %v370 = vadd.f32 0.0, %v369
  %v371 = vpop.f32.mrf.mxu0
  %372 = vdwg.mxu0
  %v373 = vmul.f32 %v53, %v335
  %v374 = vmul.f32 %v58, %v340
  %v375 = vmul.f32 %v63, %v345
  %v376 = vmul.f32 %v68, %v350
  %v377 = vmul.f32 %v73, %v355
  %v378 = vmul.f32 %v78, %v360
  %v379 = vmul.f32 %v83, %v365
  %v380 = vmul.f32 %v88, %v370
  %v381 = vsub.f32 %v244, %v373
  %v382 = vsub.f32 %v245, %v374
  %v383 = vsub.f32 %v246, %v375
  %v384 = vsub.f32 %v247, %v376
  %v385 = vsub.f32 %v248, %v377
  %v386 = vsub.f32 %v249, %v378
  %v387 = vsub.f32 %v250, %v379
  %v388 = vsub.f32 %v251, %v380
  %v389 = vmul.f32 %v381, -0.05
  %v390 = vmul.f32 %v382, -0.05
  %v391 = vmul.f32 %v383, -0.05
  %v392 = vmul.f32 %v384, -0.05
  %v393 = vmul.f32 %v385, -0.05
  %v394 = vmul.f32 %v386, -0.05
  %v395 = vmul.f32 %v387, -0.05
  %v396 = vmul.f32 %v388, -0.05
  %v397 = vadd.f32 %v252, %v389
  %v398 = vadd.f32 %v253, %v390
  %v399 = vadd.f32 %v254, %v391
  %v400 = vadd.f32 %v255, %v392
  %v401 = vadd.f32 %v256, %v393
  %v402 = vadd.f32 %v257, %v394
  %v403 = vadd.f32 %v258, %v395
  %v404 = vadd.f32 %v259, %v396
  %v405 = vmul.f32 %v53, %v389
  %v406 = vmul.f32 %v58, %v390
  %v407 = vmul.f32 %v63, %v391
  %v408 = vmul.f32 %v68, %v392
  %v409 = vmul.f32 %v73, %v393
  %v410 = vmul.f32 %v78, %v394
  %v411 = vmul.f32 %v83, %v395
  %v412 = vmul.f32 %v88, %v396
  %413 = vmatprep.subr.mxu0 0.0
  %414 = vmatpush1.msra.mxu0 0.0
  %415 = vmatprep.subr.mxu0 0.0
  %416 = vmatpush1.msra.mxu0 0.0
  %417 = vmatprep.subr.mxu0 0.0
  %418 = vmatpush1.msra.mxu0 0.0
  %419 = vmatprep.subr.mxu0 0.0
  %420 = vmatpush1.msra.mxu0 0.0
  %421 = vmatprep.subr.mxu0 0.0
  %422 = vmatpush1.msra.mxu0 0.0
  %423 = vmatprep.subr.mxu0 0.0
  %424 = vmatpush1.msra.mxu0 0.0
  %425 = vmatprep.subr.mxu0 0.0
  %426 = vmatpush1.msra.mxu0 0.0
  %427 = vmatprep.subr.mxu0 0.0
  %428 = vmatpush1.msra.mxu0 0.0
  %429 = vmatprep.subr.mxu0 0.0
  %430 = vmatpush1.msra.mxu0 %v412
  %431 = vmatprep.subr.mxu0 0.0
  %432 = vmatpush1.msra.mxu0 %v411
  %433 = vmatprep.subr.mxu0 0.0
  %434 = vmatpush1.msra.mxu0 %v410
  %435 = vmatprep.subr.mxu0 0.0
  %436 = vmatpush1.msra.mxu0 %v409
  %437 = vmatprep.subr.mxu0 0.0
  %438 = vmatpush1.msra.mxu0 %v408
  %439 = vmatprep.subr.mxu0 0.0
  %440 = vmatpush1.msra.mxu0 %v407
  %441 = vmatprep.subr.mxu0 0.0
  %442 = vmatpush1.msra.mxu0 %v406
  %443 = vmatprep.subr.mxu0 0.0
  %444 = vmatpush1.msra.mxu0 %v405
  %445 = vmatprep.subr.mxu0 0.0
  %446 = vmatpush2.msra.mxu0 0.0
  %447 = vmatprep.subr.mxu0 0.0
  %448 = vmatpush2.msra.mxu0 0.0
  %449 = vmatprep.subr.mxu0 0.0
  %450 = vmatpush2.msra.mxu0 0.0
  %451 = vmatprep.subr.mxu0 0.0
  %452 = vmatpush2.msra.mxu0 0.0
  %453 = vmatprep.subr.mxu0 0.0
  %454 = vmatpush2.msra.mxu0 0.0
  %455 = vmatprep.subr.mxu0 0.0
  %456 = vmatpush2.msra.mxu0 0.0
  %457 = vmatprep.subr.mxu0 0.0
  %458 = vmatpush2.msra.mxu0 0.0
  %459 = vmatprep.subr.mxu0 0.0
  %460 = vmatpush2.msra.mxu0 0.0
  %461 = vmatprep.subr.mxu0 0.0
  %462 = vmatpush2.msra.mxu0 0.0
  %463 = vmatprep.subr.mxu0 0.0
  %464 = vmatpush2.msra.mxu0 0.0
  %465 = vmatprep.subr.mxu0 0.0
  %466 = vmatpush2.msra.mxu0 0.0
  %467 = vmatprep.subr.mxu0 0.0
  %468 = vmatpush2.msra.mxu0 0.0
  %469 = vmatprep.subr.mxu0 0.0
  %470 = vmatpush2.msra.mxu0 0.0
  %471 = vmatprep.subr.mxu0 0.0
  %472 = vmatpush2.msra.mxu0 0.0
  %473 = vmatprep.subr.mxu0 0.0
  %474 = vmatpush2.msra.mxu0 0.0
  %475 = vmatprep.subr.mxu0 0.0
  %476 = vmatpush2.msra.mxu0 0.0
  %477 = vmatprep.mubr.f32.mxu0 0.0
  %478 = vmatmul.mubr.f32.gmra.mxu0 %v100
  %v479 = vpop.f32.mrf.mxu0
  %v480 = vadd.f32 0.0, %v479
  %v481 = vpop.f32.mrf.mxu0
  %482 = vmatprep.mubr.f32.mxu0 0.0
  %483 = vmatmul.mubr.f32.gmra.mxu0 %v103
  %v484 = vpop.f32.mrf.mxu0
  %v485 = vadd.f32 0.0, %v484
  %v486 = vpop.f32.mrf.mxu0
  %487 = vmatprep.mubr.f32.mxu0 0.0
  %488 = vmatmul.mubr.f32.gmra.mxu0 %v106
  %v489 = vpop.f32.mrf.mxu0
  %v490 = vadd.f32 0.0, %v489
  %v491 = vpop.f32.mrf.mxu0
  %492 = vmatprep.mubr.f32.mxu0 0.0
  %493 = vmatmul.mubr.f32.gmra.mxu0 %v109
  %v494 = vpop.f32.mrf.mxu0
  %v495 = vadd.f32 0.0, %v494
  %v496 = vpop.f32.mrf.mxu0
  %497 = vmatprep.mubr.f32.mxu0 0.0
  %498 = vmatmul.mubr.f32.gmra.mxu0 %v112
  %v499 = vpop.f32.mrf.mxu0
  %v500 = vadd.f32 0.0, %v499
  %v501 = vpop.f32.mrf.mxu0
  %502 = vmatprep.mubr.f32.mxu0 0.0
  %503 = vmatmul.mubr.f32.gmra.mxu0 %v115
  %v504 = vpop.f32.mrf.mxu0
  %v505 = vadd.f32 0.0, %v504
  %v506 = vpop.f32.mrf.mxu0
  %507 = vmatprep.mubr.f32.mxu0 0.0
  %508 = vmatmul.mubr.f32.gmra.mxu0 %v118
  %v509 = vpop.f32.mrf.mxu0
  %v510 = vadd.f32 0.0, %v509
  %v511 = vpop.f32.mrf.mxu0
  %512 = vmatprep.mubr.f32.mxu0 0.0
  %513 = vmatmul.mubr.f32.gmra.mxu0 %v121
  %v514 = vpop.f32.mrf.mxu0
  %v515 = vadd.f32 0.0, %v514
  %v516 = vpop.f32.mrf.mxu0
  %517 = vdwg.mxu0
  %v518 = vmul.f32 %v53, %v480
  %v519 = vmul.f32 %v58, %v485
  %v520 = vmul.f32 %v63, %v490
  %v521 = vmul.f32 %v68, %v495
  %v522 = vmul.f32 %v73, %v500
  %v523 = vmul.f32 %v78, %v505
  %v524 = vmul.f32 %v83, %v510
  %v525 = vmul.f32 %v88, %v515
  %v526 = vsub.f32 %v389, %v518
  %v527 = vsub.f32 %v390, %v519
  %v528 = vsub.f32 %v391, %v520
  %v529 = vsub.f32 %v392, %v521
  %v530 = vsub.f32 %v393, %v522
  %v531 = vsub.f32 %v394, %v523
  %v532 = vsub.f32 %v395, %v524
  %v533 = vsub.f32 %v396, %v525
  %v534 = vmul.f32 %v526, -0.033333335
  %v535 = vmul.f32 %v527, -0.033333335
  %v536 = vmul.f32 %v528, -0.033333335
  %v537 = vmul.f32 %v529, -0.033333335
  %v538 = vmul.f32 %v530, -0.033333335
  %v539 = vmul.f32 %v531, -0.033333335
  %v540 = vmul.f32 %v532, -0.033333335
  %v541 = vmul.f32 %v533, -0.033333335
  %v542 = vadd.f32 %v397, %v534
  %v543 = vadd.f32 %v398, %v535
  %v544 = vadd.f32 %v399, %v536
  %v545 = vadd.f32 %v400, %v537
  %v546 = vadd.f32 %v401, %v538
  %v547 = vadd.f32 %v402, %v539
  %v548 = vadd.f32 %v403, %v540
  %v549 = vadd.f32 %v404, %v541
  %v550 = vmul.f32 %v53, %v534
  %v551 = vmul.f32 %v58, %v535
  %v552 = vmul.f32 %v63, %v536
  %v553 = vmul.f32 %v68, %v537
  %v554 = vmul.f32 %v73, %v538
  %v555 = vmul.f32 %v78, %v539
  %v556 = vmul.f32 %v83, %v540
  %v557 = vmul.f32 %v88, %v541
  %558 = vmatprep.subr.mxu0 0.0
  %559 = vmatpush1.msra.mxu0 0.0
  %560 = vmatprep.subr.mxu0 0.0
  %561 = vmatpush1.msra.mxu0 0.0
  %562 = vmatprep.subr.mxu0 0.0
  %563 = vmatpush1.msra.mxu0 0.0
  %564 = vmatprep.subr.mxu0 0.0
  %565 = vmatpush1.msra.mxu0 0.0
  %566 = vmatprep.subr.mxu0 0.0
  %567 = vmatpush1.msra.mxu0 0.0
  %568 = vmatprep.subr.mxu0 0.0
  %569 = vmatpush1.msra.mxu0 0.0
  %570 = vmatprep.subr.mxu0 0.0
  %571 = vmatpush1.msra.mxu0 0.0
  %572 = vmatprep.subr.mxu0 0.0
  %573 = vmatpush1.msra.mxu0 0.0
  %574 = vmatprep.subr.mxu0 0.0
  %575 = vmatpush1.msra.mxu0 %v557
  %576 = vmatprep.subr.mxu0 0.0
  %577 = vmatpush1.msra.mxu0 %v556
  %578 = vmatprep.subr.mxu0 0.0
  %579 = vmatpush1.msra.mxu0 %v555
  %580 = vmatprep.subr.mxu0 0.0
  %581 = vmatpush1.msra.mxu0 %v554
  %582 = vmatprep.subr.mxu0 0.0
  %583 = vmatpush1.msra.mxu0 %v553
  %584 = vmatprep.subr.mxu0 0.0
  %585 = vmatpush1.msra.mxu0 %v552
  %586 = vmatprep.subr.mxu0 0.0
  %587 = vmatpush1.msra.mxu0 %v551
  %588 = vmatprep.subr.mxu0 0.0
  %589 = vmatpush1.msra.mxu0 %v550
  %590 = vmatprep.subr.mxu0 0.0
  %591 = vmatpush2.msra.mxu0 0.0
  %592 = vmatprep.subr.mxu0 0.0
  %593 = vmatpush2.msra.mxu0 0.0
  %594 = vmatprep.subr.mxu0 0.0
  %595 = vmatpush2.msra.mxu0 0.0
  %596 = vmatprep.subr.mxu0 0.0
  %597 = vmatpush2.msra.mxu0 0.0
  %598 = vmatprep.subr.mxu0 0.0
  %599 = vmatpush2.msra.mxu0 0.0
  %600 = vmatprep.subr.mxu0 0.0
  %601 = vmatpush2.msra.mxu0 0.0
  %602 = vmatprep.subr.mxu0 0.0
  %603 = vmatpush2.msra.mxu0 0.0
  %604 = vmatprep.subr.mxu0 0.0
  %605 = vmatpush2.msra.mxu0 0.0
  %606 = vmatprep.subr.mxu0 0.0
  %607 = vmatpush2.msra.mxu0 0.0
  %608 = vmatprep.subr.mxu0 0.0
  %609 = vmatpush2.msra.mxu0 0.0
  %610 = vmatprep.subr.mxu0 0.0
  %611 = vmatpush2.msra.mxu0 0.0
  %612 = vmatprep.subr.mxu0 0.0
  %613 = vmatpush2.msra.mxu0 0.0
  %614 = vmatprep.subr.mxu0 0.0
  %615 = vmatpush2.msra.mxu0 0.0
  %616 = vmatprep.subr.mxu0 0.0
  %617 = vmatpush2.msra.mxu0 0.0
  %618 = vmatprep.subr.mxu0 0.0
  %619 = vmatpush2.msra.mxu0 0.0
  %620 = vmatprep.subr.mxu0 0.0
  %621 = vmatpush2.msra.mxu0 0.0
  %622 = vmatprep.mubr.f32.mxu0 0.0
  %623 = vmatmul.mubr.f32.gmra.mxu0 %v100
  %v624 = vpop.f32.mrf.mxu0
  %v625 = vadd.f32 0.0, %v624
  %v626 = vpop.f32.mrf.mxu0
  %627 = vmatprep.mubr.f32.mxu0 0.0
  %628 = vmatmul.mubr.f32.gmra.mxu0 %v103
  %v629 = vpop.f32.mrf.mxu0
  %v630 = vadd.f32 0.0, %v629
  %v631 = vpop.f32.mrf.mxu0
  %632 = vmatprep.mubr.f32.mxu0 0.0
  %633 = vmatmul.mubr.f32.gmra.mxu0 %v106
  %v634 = vpop.f32.mrf.mxu0
  %v635 = vadd.f32 0.0, %v634
  %v636 = vpop.f32.mrf.mxu0
  %637 = vmatprep.mubr.f32.mxu0 0.0
  %638 = vmatmul.mubr.f32.gmra.mxu0 %v109
  %v639 = vpop.f32.mrf.mxu0
  %v640 = vadd.f32 0.0, %v639
  %v641 = vpop.f32.mrf.mxu0
  %642 = vmatprep.mubr.f32.mxu0 0.0
  %643 = vmatmul.mubr.f32.gmra.mxu0 %v112
  %v644 = vpop.f32.mrf.mxu0
  %v645 = vadd.f32 0.0, %v644
  %v646 = vpop.f32.mrf.mxu0
  %647 = vmatprep.mubr.f32.mxu0 0.0
  %648 = vmatmul.mubr.f32.gmra.mxu0 %v115
  %v649 = vpop.f32.mrf.mxu0
  %v650 = vadd.f32 0.0, %v649
  %v651 = vpop.f32.mrf.mxu0
  %652 = vmatprep.mubr.f32.mxu0 0.0
  %653 = vmatmul.mubr.f32.gmra.mxu0 %v118
  %v654 = vpop.f32.mrf.mxu0
  %v655 = vadd.f32 0.0, %v654
  %v656 = vpop.f32.mrf.mxu0
  %657 = vmatprep.mubr.f32.mxu0 0.0
  %658 = vmatmul.mubr.f32.gmra.mxu0 %v121
  %v659 = vpop.f32.mrf.mxu0
  %v660 = vadd.f32 0.0, %v659
  %v661 = vpop.f32.mrf.mxu0
  %662 = vdwg.mxu0
  %v663 = vmul.f32 %v53, %v625
  %v664 = vmul.f32 %v58, %v630
  %v665 = vmul.f32 %v63, %v635
  %v666 = vmul.f32 %v68, %v640
  %v667 = vmul.f32 %v73, %v645
  %v668 = vmul.f32 %v78, %v650
  %v669 = vmul.f32 %v83, %v655
  %v670 = vmul.f32 %v88, %v660
  %v671 = vsub.f32 %v534, %v663
  %v672 = vsub.f32 %v535, %v664
  %v673 = vsub.f32 %v536, %v665
  %v674 = vsub.f32 %v537, %v666
  %v675 = vsub.f32 %v538, %v667
  %v676 = vsub.f32 %v539, %v668
  %v677 = vsub.f32 %v540, %v669
  %v678 = vsub.f32 %v541, %v670
  %v679 = vmul.f32 %v671, -0.025
  %v680 = vmul.f32 %v672, -0.025
  %v681 = vmul.f32 %v673, -0.025
  %v682 = vmul.f32 %v674, -0.025
  %v683 = vmul.f32 %v675, -0.025
  %v684 = vmul.f32 %v676, -0.025
  %v685 = vmul.f32 %v677, -0.025
  %v686 = vmul.f32 %v678, -0.025
  %v687 = vadd.f32 %v542, %v679
  %v688 = vadd.f32 %v543, %v680
  %v689 = vadd.f32 %v544, %v681
  %v690 = vadd.f32 %v545, %v682
  %v691 = vadd.f32 %v546, %v683
  %v692 = vadd.f32 %v547, %v684
  %v693 = vadd.f32 %v548, %v685
  %v694 = vadd.f32 %v549, %v686
  %v695 = vld [vmem:[%s3] sm:$0xff]
  %v696 = vld [vmem:[%s3 + $0x8] sm:$0xff]
  %v697 = vld [vmem:[%s3 + $0x10] sm:$0xff]
  %v698 = vld [vmem:[%s3 + $0x18] sm:$0xff]
  %v699 = vld [vmem:[%s3 + $0x20] sm:$0xff]
  %v700 = vld [vmem:[%s3 + $0x28] sm:$0xff]
  %v701 = vld [vmem:[%s3 + $0x30] sm:$0xff]
  %v702 = vld [vmem:[%s3 + $0x38] sm:$0xff]
  %vm703 = vcmask 261120
  %v705 = vsel %vm703, %v687, 0
  %v708 = vsel %vm703, %v688, 0
  %v711 = vsel %vm703, %v689, 0
  %v714 = vsel %vm703, %v690, 0
  %v717 = vsel %vm703, %v691, 0
  %v720 = vsel %vm703, %v692, 0
  %v723 = vsel %vm703, %v693, 0
  %v726 = vsel %vm703, %v694, 0
  %728 = vmatprep.subr.mxu0 0.0
  %729 = vmatpush1.msra.mxu0 0.0
  %730 = vmatprep.subr.mxu0 0.0
  %731 = vmatpush1.msra.mxu0 0.0
  %732 = vmatprep.subr.mxu0 0.0
  %733 = vmatpush1.msra.mxu0 0.0
  %734 = vmatprep.subr.mxu0 0.0
  %735 = vmatpush1.msra.mxu0 0.0
  %736 = vmatprep.subr.mxu0 0.0
  %737 = vmatpush1.msra.mxu0 0.0
  %738 = vmatprep.subr.mxu0 0.0
  %739 = vmatpush1.msra.mxu0 0.0
  %740 = vmatprep.subr.mxu0 0.0
  %741 = vmatpush1.msra.mxu0 0.0
  %742 = vmatprep.subr.mxu0 0.0
  %743 = vmatpush1.msra.mxu0 0.0
  %744 = vmatprep.subr.mxu0 0.0
  %745 = vmatpush1.msra.mxu0 0.0
  %746 = vmatprep.subr.mxu0 0.0
  %747 = vmatpush1.msra.mxu0 0.0
  %748 = vmatprep.subr.mxu0 0.0
  %749 = vmatpush1.msra.mxu0 0.0
  %750 = vmatprep.subr.mxu0 0.0
  %751 = vmatpush1.msra.mxu0 0.0
  %752 = vmatprep.subr.mxu0 0.0
  %753 = vmatpush1.msra.mxu0 %v702
  %754 = vmatprep.subr.mxu0 0.0
  %755 = vmatpush1.msra.mxu0 %v701
  %756 = vmatprep.subr.mxu0 0.0
  %757 = vmatpush1.msra.mxu0 %v700
  %758 = vmatprep.subr.mxu0 0.0
  %759 = vmatpush1.msra.mxu0 %v699
  %760 = vmatprep.subr.mxu0 0.0
  %761 = vmatpush2.msra.mxu0 0.0
  %762 = vmatprep.subr.mxu0 0.0
  %763 = vmatpush2.msra.mxu0 0.0
  %764 = vmatprep.subr.mxu0 0.0
  %765 = vmatpush2.msra.mxu0 0.0
  %766 = vmatprep.subr.mxu0 0.0
  %767 = vmatpush2.msra.mxu0 0.0
  %768 = vmatprep.subr.mxu0 0.0
  %769 = vmatpush2.msra.mxu0 0.0
  %770 = vmatprep.subr.mxu0 0.0
  %771 = vmatpush2.msra.mxu0 0.0
  %772 = vmatprep.subr.mxu0 0.0
  %773 = vmatpush2.msra.mxu0 0.0
  %774 = vmatprep.subr.mxu0 0.0
  %775 = vmatpush2.msra.mxu0 0.0
  %776 = vmatprep.subr.mxu0 0.0
  %777 = vmatpush2.msra.mxu0 0.0
  %778 = vmatprep.subr.mxu0 0.0
  %779 = vmatpush2.msra.mxu0 0.0
  %780 = vmatprep.subr.mxu0 0.0
  %781 = vmatpush2.msra.mxu0 0.0
  %782 = vmatprep.subr.mxu0 0.0
  %783 = vmatpush2.msra.mxu0 0.0
  %784 = vmatprep.subr.mxu0 0.0
  %785 = vmatpush2.msra.mxu0 0.0
  %786 = vmatprep.subr.mxu0 0.0
  %787 = vmatpush2.msra.mxu0 0.0
  %788 = vmatprep.subr.mxu0 0.0
  %789 = vmatpush2.msra.mxu0 0.0
  %790 = vmatprep.subr.mxu0 0.0
  %791 = vmatpush2.msra.mxu0 0.0
  %792 = vmatprep.mubr.f32.mxu0 0.0
  %793 = vmatmul.mubr.f32.gmra.mxu0 %v705
  %v794 = vpop.f32.mrf.mxu0
  %v795 = vadd.f32 0.0, %v794
  %v796 = vpop.f32.mrf.mxu0
  %797 = vmatprep.mubr.f32.mxu0 0.0
  %798 = vmatmul.mubr.f32.gmra.mxu0 %v708
  %v799 = vpop.f32.mrf.mxu0
  %v800 = vadd.f32 0.0, %v799
  %v801 = vpop.f32.mrf.mxu0
  %802 = vmatprep.mubr.f32.mxu0 0.0
  %803 = vmatmul.mubr.f32.gmra.mxu0 %v711
  %v804 = vpop.f32.mrf.mxu0
  %v805 = vadd.f32 0.0, %v804
  %v806 = vpop.f32.mrf.mxu0
  %807 = vmatprep.mubr.f32.mxu0 0.0
  %808 = vmatmul.mubr.f32.gmra.mxu0 %v714
  %v809 = vpop.f32.mrf.mxu0
  %v810 = vadd.f32 0.0, %v809
  %v811 = vpop.f32.mrf.mxu0
  %812 = vmatprep.mubr.f32.mxu0 0.0
  %813 = vmatmul.mubr.f32.gmra.mxu0 %v717
  %v814 = vpop.f32.mrf.mxu0
  %v815 = vadd.f32 0.0, %v814
  %v816 = vpop.f32.mrf.mxu0
  %817 = vmatprep.mubr.f32.mxu0 0.0
  %818 = vmatmul.mubr.f32.gmra.mxu0 %v720
  %v819 = vpop.f32.mrf.mxu0
  %v820 = vadd.f32 0.0, %v819
  %v821 = vpop.f32.mrf.mxu0
  %822 = vmatprep.mubr.f32.mxu0 0.0
  %823 = vmatmul.mubr.f32.gmra.mxu0 %v723
  %v824 = vpop.f32.mrf.mxu0
  %v825 = vadd.f32 0.0, %v824
  %v826 = vpop.f32.mrf.mxu0
  %827 = vmatprep.mubr.f32.mxu0 0.0
  %828 = vmatmul.mubr.f32.gmra.mxu0 %v726
  %v829 = vpop.f32.mrf.mxu0
  %v830 = vadd.f32 0.0, %v829
  %v831 = vpop.f32.mrf.mxu0
  %832 = vdwg.mxu0
  %v834 = vsel %vm703, %v26, 0
  %v837 = vsel %vm703, %v27, 0
  %v840 = vsel %vm703, %v28, 0
  %v843 = vsel %vm703, %v29, 0
  %v846 = vsel %vm703, %v30, 0
  %v849 = vsel %vm703, %v31, 0
  %v852 = vsel %vm703, %v32, 0
  %v855 = vsel %vm703, %v33, 0
  %857 = vmatprep.subr.mxu0 0.0
  %858 = vmatpush1.msra.mxu0 0.0
  %859 = vmatprep.subr.mxu0 0.0
  %860 = vmatpush1.msra.mxu0 0.0
  %861 = vmatprep.subr.mxu0 0.0
  %862 = vmatpush1.msra.mxu0 0.0
  %863 = vmatprep.subr.mxu0 0.0
  %864 = vmatpush1.msra.mxu0 0.0
  %865 = vmatprep.subr.mxu0 0.0
  %866 = vmatpush1.msra.mxu0 0.0
  %867 = vmatprep.subr.mxu0 0.0
  %868 = vmatpush1.msra.mxu0 0.0
  %869 = vmatprep.subr.mxu0 0.0
  %870 = vmatpush1.msra.mxu0 0.0
  %871 = vmatprep.subr.mxu0 0.0
  %872 = vmatpush1.msra.mxu0 0.0
  %873 = vmatprep.subr.mxu0 0.0
  %874 = vmatpush1.msra.mxu0 0.0
  %875 = vmatprep.subr.mxu0 0.0
  %876 = vmatpush1.msra.mxu0 0.0
  %877 = vmatprep.subr.mxu0 0.0
  %878 = vmatpush1.msra.mxu0 0.0
  %879 = vmatprep.subr.mxu0 0.0
  %880 = vmatpush1.msra.mxu0 0.0
  %881 = vmatprep.subr.mxu0 0.0
  %882 = vmatpush1.msra.mxu0 %v698
  %883 = vmatprep.subr.mxu0 0.0
  %884 = vmatpush1.msra.mxu0 %v697
  %885 = vmatprep.subr.mxu0 0.0
  %886 = vmatpush1.msra.mxu0 %v696
  %887 = vmatprep.subr.mxu0 0.0
  %888 = vmatpush1.msra.mxu0 %v695
  %889 = vmatprep.subr.mxu0 0.0
  %890 = vmatpush2.msra.mxu0 0.0
  %891 = vmatprep.subr.mxu0 0.0
  %892 = vmatpush2.msra.mxu0 0.0
  %893 = vmatprep.subr.mxu0 0.0
  %894 = vmatpush2.msra.mxu0 0.0
  %895 = vmatprep.subr.mxu0 0.0
  %896 = vmatpush2.msra.mxu0 0.0
  %897 = vmatprep.subr.mxu0 0.0
  %898 = vmatpush2.msra.mxu0 0.0
  %899 = vmatprep.subr.mxu0 0.0
  %900 = vmatpush2.msra.mxu0 0.0
  %901 = vmatprep.subr.mxu0 0.0
  %902 = vmatpush2.msra.mxu0 0.0
  %903 = vmatprep.subr.mxu0 0.0
  %904 = vmatpush2.msra.mxu0 0.0
  %905 = vmatprep.subr.mxu0 0.0
  %906 = vmatpush2.msra.mxu0 0.0
  %907 = vmatprep.subr.mxu0 0.0
  %908 = vmatpush2.msra.mxu0 0.0
  %909 = vmatprep.subr.mxu0 0.0
  %910 = vmatpush2.msra.mxu0 0.0
  %911 = vmatprep.subr.mxu0 0.0
  %912 = vmatpush2.msra.mxu0 0.0
  %913 = vmatprep.subr.mxu0 0.0
  %914 = vmatpush2.msra.mxu0 0.0
  %915 = vmatprep.subr.mxu0 0.0
  %916 = vmatpush2.msra.mxu0 0.0
  %917 = vmatprep.subr.mxu0 0.0
  %918 = vmatpush2.msra.mxu0 0.0
  %919 = vmatprep.subr.mxu0 0.0
  %920 = vmatpush2.msra.mxu0 0.0
  %921 = vmatprep.mubr.f32.mxu0 0.0
  %922 = vmatmul.mubr.f32.gmra.mxu0 %v834
  %v923 = vpop.f32.mrf.mxu0
  %v924 = vadd.f32 %v795, %v923
  %v925 = vpop.f32.mrf.mxu0
  %926 = vmatprep.mubr.f32.mxu0 0.0
  %927 = vmatmul.mubr.f32.gmra.mxu0 %v837
  %v928 = vpop.f32.mrf.mxu0
  %v929 = vadd.f32 %v800, %v928
  %v930 = vpop.f32.mrf.mxu0
  %931 = vmatprep.mubr.f32.mxu0 0.0
  %932 = vmatmul.mubr.f32.gmra.mxu0 %v840
  %v933 = vpop.f32.mrf.mxu0
  %v934 = vadd.f32 %v805, %v933
  %v935 = vpop.f32.mrf.mxu0
  %936 = vmatprep.mubr.f32.mxu0 0.0
  %937 = vmatmul.mubr.f32.gmra.mxu0 %v843
  %v938 = vpop.f32.mrf.mxu0
  %v939 = vadd.f32 %v810, %v938
  %v940 = vpop.f32.mrf.mxu0
  %941 = vmatprep.mubr.f32.mxu0 0.0
  %942 = vmatmul.mubr.f32.gmra.mxu0 %v846
  %v943 = vpop.f32.mrf.mxu0
  %v944 = vadd.f32 %v815, %v943
  %v945 = vpop.f32.mrf.mxu0
  %946 = vmatprep.mubr.f32.mxu0 0.0
  %947 = vmatmul.mubr.f32.gmra.mxu0 %v849
  %v948 = vpop.f32.mrf.mxu0
  %v949 = vadd.f32 %v820, %v948
  %v950 = vpop.f32.mrf.mxu0
  %951 = vmatprep.mubr.f32.mxu0 0.0
  %952 = vmatmul.mubr.f32.gmra.mxu0 %v852
  %v953 = vpop.f32.mrf.mxu0
  %v954 = vadd.f32 %v825, %v953
  %v955 = vpop.f32.mrf.mxu0
  %956 = vmatprep.mubr.f32.mxu0 0.0
  %957 = vmatmul.mubr.f32.gmra.mxu0 %v855
  %v958 = vpop.f32.mrf.mxu0
  %v959 = vadd.f32 %v830, %v958
  %v960 = vpop.f32.mrf.mxu0
  %961 = vdwg.mxu0
  %v962 = vld [vmem:[%s4] sm:$0x1]
  %v964 = vlaneseq
  %v965 = vshrl.u32 %v964, 7
  %v966 = vsub.s32 0, %v965
  %v967 = vrot.slane %v962, %v966
  %v969 = vadd.f32 %v924, %v967
  %v970 = vadd.f32 %v929, %v967
  %v971 = vadd.f32 %v934, %v967
  %v972 = vadd.f32 %v939, %v967
  %v973 = vadd.f32 %v944, %v967
  %v974 = vadd.f32 %v949, %v967
  %v975 = vadd.f32 %v954, %v967
  %v976 = vadd.f32 %v959, %v967
  %v977 = vmul.f32 %v969, 0.5
  %v978 = vmul.f32 %v970, 0.5
  %v979 = vmul.f32 %v971, 0.5
  %v980 = vmul.f32 %v972, 0.5
  %v981 = vmul.f32 %v973, 0.5
  %v982 = vmul.f32 %v974, 0.5
  %v983 = vmul.f32 %v975, 0.5
  %v984 = vmul.f32 %v976, 0.5
  %v985 = vmul.f32 %v969, 0.70710677
  %v986 = vmul.f32 %v970, 0.70710677
  %v987 = vmul.f32 %v971, 0.70710677
  %v988 = vmul.f32 %v972, 0.70710677
  %v989 = vmul.f32 %v973, 0.70710677
  %v990 = vmul.f32 %v974, 0.70710677
  %v991 = vmul.f32 %v975, 0.70710677
  %v992 = vmul.f32 %v976, 0.70710677
  %vm993 = vcmp.ge.f32.partialorder %v985, 0.0
  %vm994 = vcmp.ge.f32.partialorder %v986, 0.0
  %vm995 = vcmp.ge.f32.partialorder %v987, 0.0
  %vm996 = vcmp.ge.f32.partialorder %v988, 0.0
  %vm997 = vcmp.ge.f32.partialorder %v989, 0.0
  %vm998 = vcmp.ge.f32.partialorder %v990, 0.0
  %vm999 = vcmp.ge.f32.partialorder %v991, 0.0
  %vm1000 = vcmp.ge.f32.partialorder %v992, 0.0
  %v1001 = vsel %vm993, 1.0, -1.0
  %v1002 = vsel %vm994, 1.0, -1.0
  %v1003 = vsel %vm995, 1.0, -1.0
  %v1004 = vsel %vm996, 1.0, -1.0
  %v1005 = vsel %vm997, 1.0, -1.0
  %v1006 = vsel %vm998, 1.0, -1.0
  %v1007 = vsel %vm999, 1.0, -1.0
  %v1008 = vsel %vm1000, 1.0, -1.0
  %v1009 = vand.u32 2147483647, %v985
  %v1010 = vand.u32 2147483647, %v986
  %v1011 = vand.u32 2147483647, %v987
  %v1012 = vand.u32 2147483647, %v988
  %v1013 = vand.u32 2147483647, %v989
  %v1014 = vand.u32 2147483647, %v990
  %v1015 = vand.u32 2147483647, %v991
  %v1016 = vand.u32 2147483647, %v992
  %v1017 = vmul.f32 %v1009, 0.3275911
  %v1018 = vmul.f32 %v1010, 0.3275911
  %v1019 = vmul.f32 %v1011, 0.3275911
  %v1020 = vmul.f32 %v1012, 0.3275911
  %v1021 = vmul.f32 %v1013, 0.3275911
  %v1022 = vmul.f32 %v1014, 0.3275911
  %v1023 = vmul.f32 %v1015, 0.3275911
  %v1024 = vmul.f32 %v1016, 0.3275911
  %v1025 = vadd.f32 %v1017, 1.0
  %v1026 = vadd.f32 %v1018, 1.0
  %v1027 = vadd.f32 %v1019, 1.0
  %v1028 = vadd.f32 %v1020, 1.0
  %v1029 = vadd.f32 %v1021, 1.0
  %v1030 = vadd.f32 %v1022, 1.0
  %v1031 = vadd.f32 %v1023, 1.0
  %v1032 = vadd.f32 %v1024, 1.0
  %v1033 = vrcp.pop %v1025
  %v1034 = vmul.f32 1.0, %v1033
  %v1035 = vrcp.pop %v1026
  %v1036 = vmul.f32 1.0, %v1035
  %v1037 = vrcp.pop %v1027
  %v1038 = vmul.f32 1.0, %v1037
  %v1039 = vrcp.pop %v1028
  %v1040 = vmul.f32 1.0, %v1039
  %v1041 = vrcp.pop %v1029
  %v1042 = vmul.f32 1.0, %v1041
  %v1043 = vrcp.pop %v1030
  %v1044 = vmul.f32 1.0, %v1043
  %v1045 = vrcp.pop %v1031
  %v1046 = vmul.f32 1.0, %v1045
  %v1047 = vrcp.pop %v1032
  %v1048 = vmul.f32 1.0, %v1047
  %v1049 = vmul.f32 %v1034, 1.0614054
  %v1050 = vmul.f32 %v1036, 1.0614054
  %v1051 = vmul.f32 %v1038, 1.0614054
  %v1052 = vmul.f32 %v1040, 1.0614054
  %v1053 = vmul.f32 %v1042, 1.0614054
  %v1054 = vmul.f32 %v1044, 1.0614054
  %v1055 = vmul.f32 %v1046, 1.0614054
  %v1056 = vmul.f32 %v1048, 1.0614054
  %v1057 = vadd.f32 %v1049, -1.4531521
  %v1058 = vadd.f32 %v1050, -1.4531521
  %v1059 = vadd.f32 %v1051, -1.4531521
  %v1060 = vadd.f32 %v1052, -1.4531521
  %v1061 = vadd.f32 %v1053, -1.4531521
  %v1062 = vadd.f32 %v1054, -1.4531521
  %v1063 = vadd.f32 %v1055, -1.4531521
  %v1064 = vadd.f32 %v1056, -1.4531521
  %v1065 = vmul.f32 %v1057, %v1034
  %v1066 = vmul.f32 %v1058, %v1036
  %v1067 = vmul.f32 %v1059, %v1038
  %v1068 = vmul.f32 %v1060, %v1040
  %v1069 = vmul.f32 %v1061, %v1042
  %v1070 = vmul.f32 %v1062, %v1044
  %v1071 = vmul.f32 %v1063, %v1046
  %v1072 = vmul.f32 %v1064, %v1048
  %v1073 = vadd.f32 %v1065, 1.4214138
  %v1074 = vadd.f32 %v1066, 1.4214138
  %v1075 = vadd.f32 %v1067, 1.4214138
  %v1076 = vadd.f32 %v1068, 1.4214138
  %v1077 = vadd.f32 %v1069, 1.4214138
  %v1078 = vadd.f32 %v1070, 1.4214138
  %v1079 = vadd.f32 %v1071, 1.4214138
  %v1080 = vadd.f32 %v1072, 1.4214138
  %v1081 = vmul.f32 %v1073, %v1034
  %v1082 = vmul.f32 %v1074, %v1036
  %v1083 = vmul.f32 %v1075, %v1038
  %v1084 = vmul.f32 %v1076, %v1040
  %v1085 = vmul.f32 %v1077, %v1042
  %v1086 = vmul.f32 %v1078, %v1044
  %v1087 = vmul.f32 %v1079, %v1046
  %v1088 = vmul.f32 %v1080, %v1048
  %v1089 = vadd.f32 %v1081, -0.28449672
  %v1090 = vadd.f32 %v1082, -0.28449672
  %v1091 = vadd.f32 %v1083, -0.28449672
  %v1092 = vadd.f32 %v1084, -0.28449672
  %v1093 = vadd.f32 %v1085, -0.28449672
  %v1094 = vadd.f32 %v1086, -0.28449672
  %v1095 = vadd.f32 %v1087, -0.28449672
  %v1096 = vadd.f32 %v1088, -0.28449672
  %v1097 = vmul.f32 %v1089, %v1034
  %v1098 = vmul.f32 %v1090, %v1036
  %v1099 = vmul.f32 %v1091, %v1038
  %v1100 = vmul.f32 %v1092, %v1040
  %v1101 = vmul.f32 %v1093, %v1042
  %v1102 = vmul.f32 %v1094, %v1044
  %v1103 = vmul.f32 %v1095, %v1046
  %v1104 = vmul.f32 %v1096, %v1048
  %v1105 = vadd.f32 %v1097, 0.2548296
  %v1106 = vadd.f32 %v1098, 0.2548296
  %v1107 = vadd.f32 %v1099, 0.2548296
  %v1108 = vadd.f32 %v1100, 0.2548296
  %v1109 = vadd.f32 %v1101, 0.2548296
  %v1110 = vadd.f32 %v1102, 0.2548296
  %v1111 = vadd.f32 %v1103, 0.2548296
  %v1112 = vadd.f32 %v1104, 0.2548296
  %v1113 = vmul.f32 %v1105, %v1034
  %v1114 = vmul.f32 %v1106, %v1036
  %v1115 = vmul.f32 %v1107, %v1038
  %v1116 = vmul.f32 %v1108, %v1040
  %v1117 = vmul.f32 %v1109, %v1042
  %v1118 = vmul.f32 %v1110, %v1044
  %v1119 = vmul.f32 %v1111, %v1046
  %v1120 = vmul.f32 %v1112, %v1048
  %v1121 = vsub.f32 0.0, %v1009
  %v1122 = vsub.f32 0.0, %v1010
  %v1123 = vsub.f32 0.0, %v1011
  %v1124 = vsub.f32 0.0, %v1012
  %v1125 = vsub.f32 0.0, %v1013
  %v1126 = vsub.f32 0.0, %v1014
  %v1127 = vsub.f32 0.0, %v1015
  %v1128 = vsub.f32 0.0, %v1016
  %v1129 = vmul.f32 %v1121, %v1009
  %v1130 = vmul.f32 %v1122, %v1010
  %v1131 = vmul.f32 %v1123, %v1011
  %v1132 = vmul.f32 %v1124, %v1012
  %v1133 = vmul.f32 %v1125, %v1013
  %v1134 = vmul.f32 %v1126, %v1014
  %v1135 = vmul.f32 %v1127, %v1015
  %v1136 = vmul.f32 %v1128, %v1016
  %v1137 = vmul.f32 %v1129, 1.442695
  %v1138 = vpow.pop %v1137
  %v1139 = vmul.f32 %v1130, 1.442695
  %v1140 = vpow.pop %v1139
  %v1141 = vmul.f32 %v1131, 1.442695
  %v1142 = vpow.pop %v1141
  %v1143 = vmul.f32 %v1132, 1.442695
  %v1144 = vpow.pop %v1143
  %v1145 = vmul.f32 %v1133, 1.442695
  %v1146 = vpow.pop %v1145
  %v1147 = vmul.f32 %v1134, 1.442695
  %v1148 = vpow.pop %v1147
  %v1149 = vmul.f32 %v1135, 1.442695
  %v1150 = vpow.pop %v1149
  %v1151 = vmul.f32 %v1136, 1.442695
  %v1152 = vpow.pop %v1151
  %v1153 = vmul.f32 %v1113, %v1138
  %v1154 = vmul.f32 %v1114, %v1140
  %v1155 = vmul.f32 %v1115, %v1142
  %v1156 = vmul.f32 %v1116, %v1144
  %v1157 = vmul.f32 %v1117, %v1146
  %v1158 = vmul.f32 %v1118, %v1148
  %v1159 = vmul.f32 %v1119, %v1150
  %v1160 = vmul.f32 %v1120, %v1152
  %v1161 = vsub.f32 1.0, %v1153
  %v1162 = vsub.f32 1.0, %v1154
  %v1163 = vsub.f32 1.0, %v1155
  %v1164 = vsub.f32 1.0, %v1156
  %v1165 = vsub.f32 1.0, %v1157
  %v1166 = vsub.f32 1.0, %v1158
  %v1167 = vsub.f32 1.0, %v1159
  %v1168 = vsub.f32 1.0, %v1160
  %v1169 = vmul.f32 %v1001, %v1161
  %v1170 = vmul.f32 %v1002, %v1162
  %v1171 = vmul.f32 %v1003, %v1163
  %v1172 = vmul.f32 %v1004, %v1164
  %v1173 = vmul.f32 %v1005, %v1165
  %v1174 = vmul.f32 %v1006, %v1166
  %v1175 = vmul.f32 %v1007, %v1167
  %v1176 = vmul.f32 %v1008, %v1168
  %v1177 = vadd.f32 %v1169, 1.0
  %v1178 = vadd.f32 %v1170, 1.0
  %v1179 = vadd.f32 %v1171, 1.0
  %v1180 = vadd.f32 %v1172, 1.0
  %v1181 = vadd.f32 %v1173, 1.0
  %v1182 = vadd.f32 %v1174, 1.0
  %v1183 = vadd.f32 %v1175, 1.0
  %v1184 = vadd.f32 %v1176, 1.0
  %v1185 = vmul.f32 %v977, %v1177
  %v1186 = vmul.f32 %v978, %v1178
  %v1187 = vmul.f32 %v979, %v1179
  %v1188 = vmul.f32 %v980, %v1180
  %v1189 = vmul.f32 %v981, %v1181
  %v1190 = vmul.f32 %v982, %v1182
  %v1191 = vmul.f32 %v983, %v1183
  %v1192 = vmul.f32 %v984, %v1184
  %v1193 = vld [vmem:[%s5] sm:$0xff]
  %v1194 = vld [vmem:[%s5 + $0x8] sm:$0xff]
  %v1195 = vld [vmem:[%s5 + $0x10] sm:$0xff]
  %v1196 = vld [vmem:[%s5 + $0x18] sm:$0xff]
  %v1197 = vld [vmem:[%s5 + $0x20] sm:$0xff]
  %v1198 = vld [vmem:[%s5 + $0x28] sm:$0xff]
  %v1199 = vld [vmem:[%s5 + $0x30] sm:$0xff]
  %v1200 = vld [vmem:[%s5 + $0x38] sm:$0xff]
  %v1201 = vld [vmem:[%s6] sm:$0x1]
  %v1203 = vlaneseq
  %v1204 = vshrl.u32 %v1203, 7
  %v1205 = vsub.s32 0, %v1204
  %v1206 = vrot.slane %v1201, %v1205
  %v1209 = vsel %vm98, %v1185, 0
  %v1212 = vsel %vm98, %v1186, 0
  %v1215 = vsel %vm98, %v1187, 0
  %v1218 = vsel %vm98, %v1188, 0
  %v1221 = vsel %vm98, %v1189, 0
  %v1224 = vsel %vm98, %v1190, 0
  %v1227 = vsel %vm98, %v1191, 0
  %v1230 = vsel %vm98, %v1192, 0
  %1232 = vmatprep.subr.mxu0 0.0
  %1233 = vmatpush1.msra.mxu0 0.0
  %1234 = vmatprep.subr.mxu0 0.0
  %1235 = vmatpush1.msra.mxu0 0.0
  %1236 = vmatprep.subr.mxu0 0.0
  %1237 = vmatpush1.msra.mxu0 0.0
  %1238 = vmatprep.subr.mxu0 0.0
  %1239 = vmatpush1.msra.mxu0 0.0
  %1240 = vmatprep.subr.mxu0 0.0
  %1241 = vmatpush1.msra.mxu0 0.0
  %1242 = vmatprep.subr.mxu0 0.0
  %1243 = vmatpush1.msra.mxu0 0.0
  %1244 = vmatprep.subr.mxu0 0.0
  %1245 = vmatpush1.msra.mxu0 0.0
  %1246 = vmatprep.subr.mxu0 0.0
  %1247 = vmatpush1.msra.mxu0 0.0
  %1248 = vmatprep.subr.mxu0 0.0
  %1249 = vmatpush1.msra.mxu0 %v1200
  %1250 = vmatprep.subr.mxu0 0.0
  %1251 = vmatpush1.msra.mxu0 %v1199
  %1252 = vmatprep.subr.mxu0 0.0
  %1253 = vmatpush1.msra.mxu0 %v1198
  %1254 = vmatprep.subr.mxu0 0.0
  %1255 = vmatpush1.msra.mxu0 %v1197
  %1256 = vmatprep.subr.mxu0 0.0
  %1257 = vmatpush1.msra.mxu0 %v1196
  %1258 = vmatprep.subr.mxu0 0.0
  %1259 = vmatpush1.msra.mxu0 %v1195
  %1260 = vmatprep.subr.mxu0 0.0
  %1261 = vmatpush1.msra.mxu0 %v1194
  %1262 = vmatprep.subr.mxu0 0.0
  %1263 = vmatpush1.msra.mxu0 %v1193
  %1264 = vmatprep.subr.mxu0 0.0
  %1265 = vmatpush2.msra.mxu0 0.0
  %1266 = vmatprep.subr.mxu0 0.0
  %1267 = vmatpush2.msra.mxu0 0.0
  %1268 = vmatprep.subr.mxu0 0.0
  %1269 = vmatpush2.msra.mxu0 0.0
  %1270 = vmatprep.subr.mxu0 0.0
  %1271 = vmatpush2.msra.mxu0 0.0
  %1272 = vmatprep.subr.mxu0 0.0
  %1273 = vmatpush2.msra.mxu0 0.0
  %1274 = vmatprep.subr.mxu0 0.0
  %1275 = vmatpush2.msra.mxu0 0.0
  %1276 = vmatprep.subr.mxu0 0.0
  %1277 = vmatpush2.msra.mxu0 0.0
  %1278 = vmatprep.subr.mxu0 0.0
  %1279 = vmatpush2.msra.mxu0 0.0
  %1280 = vmatprep.subr.mxu0 0.0
  %1281 = vmatpush2.msra.mxu0 0.0
  %1282 = vmatprep.subr.mxu0 0.0
  %1283 = vmatpush2.msra.mxu0 0.0
  %1284 = vmatprep.subr.mxu0 0.0
  %1285 = vmatpush2.msra.mxu0 0.0
  %1286 = vmatprep.subr.mxu0 0.0
  %1287 = vmatpush2.msra.mxu0 0.0
  %1288 = vmatprep.subr.mxu0 0.0
  %1289 = vmatpush2.msra.mxu0 0.0
  %1290 = vmatprep.subr.mxu0 0.0
  %1291 = vmatpush2.msra.mxu0 0.0
  %1292 = vmatprep.subr.mxu0 0.0
  %1293 = vmatpush2.msra.mxu0 0.0
  %1294 = vmatprep.subr.mxu0 0.0
  %1295 = vmatpush2.msra.mxu0 0.0
  %1296 = vmatprep.mubr.f32.mxu0 0.0
  %1297 = vmatmul.mubr.f32.gmra.mxu0 %v1209
  %v1298 = vpop.f32.mrf.mxu0
  %v1299 = vadd.f32 %v1206, %v1298
  %v1300 = vpop.f32.mrf.mxu0
  %1301 = vmatprep.mubr.f32.mxu0 0.0
  %1302 = vmatmul.mubr.f32.gmra.mxu0 %v1212
  %v1303 = vpop.f32.mrf.mxu0
  %v1304 = vadd.f32 %v1206, %v1303
  %v1305 = vpop.f32.mrf.mxu0
  %1306 = vmatprep.mubr.f32.mxu0 0.0
  %1307 = vmatmul.mubr.f32.gmra.mxu0 %v1215
  %v1308 = vpop.f32.mrf.mxu0
  %v1309 = vadd.f32 %v1206, %v1308
  %v1310 = vpop.f32.mrf.mxu0
  %1311 = vmatprep.mubr.f32.mxu0 0.0
  %1312 = vmatmul.mubr.f32.gmra.mxu0 %v1218
  %v1313 = vpop.f32.mrf.mxu0
  %v1314 = vadd.f32 %v1206, %v1313
  %v1315 = vpop.f32.mrf.mxu0
  %1316 = vmatprep.mubr.f32.mxu0 0.0
  %1317 = vmatmul.mubr.f32.gmra.mxu0 %v1221
  %v1318 = vpop.f32.mrf.mxu0
  %v1319 = vadd.f32 %v1206, %v1318
  %v1320 = vpop.f32.mrf.mxu0
  %1321 = vmatprep.mubr.f32.mxu0 0.0
  %1322 = vmatmul.mubr.f32.gmra.mxu0 %v1224
  %v1323 = vpop.f32.mrf.mxu0
  %v1324 = vadd.f32 %v1206, %v1323
  %v1325 = vpop.f32.mrf.mxu0
  %1326 = vmatprep.mubr.f32.mxu0 0.0
  %1327 = vmatmul.mubr.f32.gmra.mxu0 %v1227
  %v1328 = vpop.f32.mrf.mxu0
  %v1329 = vadd.f32 %v1206, %v1328
  %v1330 = vpop.f32.mrf.mxu0
  %1331 = vmatprep.mubr.f32.mxu0 0.0
  %1332 = vmatmul.mubr.f32.gmra.mxu0 %v1230
  %v1333 = vpop.f32.mrf.mxu0
  %v1334 = vadd.f32 %v1206, %v1333
  %v1335 = vpop.f32.mrf.mxu0
  %1336 = vdwg.mxu0
  %1337 = vst.msk [vmem:[%s7] sm:$0xff] %vm703, %v1299
  %1338 = vst.msk [vmem:[%s7 + $0x8] sm:$0xff] %vm703, %v1304
  %1339 = vst.msk [vmem:[%s7 + $0x10] sm:$0xff] %vm703, %v1309
  %1340 = vst.msk [vmem:[%s7 + $0x18] sm:$0xff] %vm703, %v1314
  %1341 = vst.msk [vmem:[%s7 + $0x20] sm:$0xff] %vm703, %v1319
  %1342 = vst.msk [vmem:[%s7 + $0x28] sm:$0xff] %vm703, %v1324
  %1343 = vst.msk [vmem:[%s7 + $0x30] sm:$0xff] %vm703, %v1329
  %1344 = vst.msk [vmem:[%s7 + $0x38] sm:$0xff] %vm703, %v1334
  // Predicated region
  $region30: #{tpu_custom_call.1} parent=0 // pred_check
    _
  $region31: #{tpu_custom_call.1} parent=0 // pred_check_branch
    %1346 = sbr.rel (0) target = $region33
  $region32: #{tpu_custom_call.1} parent=0 // pred_region
    _
  $region33: #{tpu_custom_call.1} parent=0 // pred_fallthru
    _
  // Predicated region
  $region34: #{tpu_custom_call.1} parent=0 // pred_check
    _
  $region35: #{tpu_custom_call.1} parent=0 // pred_check_branch
    %1348 = sbr.rel (0) target = $region37
  $region36: #{tpu_custom_call.1} parent=0 // pred_region
    _
  $region37: #{tpu_custom_call.1} parent=0 // pred_fallthru
    _

</llo_original>
